<compile_context>
chip_gen: v7x
topology: tpu7x:2x2x1
jax: 0.10.0
libtpu: 0.0.40
codegen_flags: <defaults>
</compile_context>

<pallas_src>
import functools

import jax
import jax.numpy as jnp
from jax.experimental import pallas as pl
from jax.experimental.pallas import tpu as pltpu


def _round_up(x, m):
    return (x + m - 1) // m * m


def _pick_tile(dim, align, max_tile):
    """Pad `dim` to `align`, split into equal aligned tiles <= max_tile.

    Returns (tile, num_tiles, padded_dim). Minimizes padding waste
    (e.g. B=300 -> tile=304 / 1 tile, instead of padding to 512)."""
    d = _round_up(max(dim, align), align)
    num = -(-d // max_tile)
    tile = _round_up(-(-d // num), align)
    return tile, num, tile * num


def _vmem_capacity_bytes():
    """Generation-aware VMEM size (v5e/v6e: 128 MiB, v7x: 64 MiB per TC)."""
    try:
        cap = getattr(pltpu.get_tpu_info(), "vmem_capacity_bytes", None)
        if cap:
            return int(cap)
    except Exception:
        pass
    return 64 << 20  # conservative fallback == v7x per-TC VMEM


def _single_k_kernel(x_ref, w_ref, b_ref, o_ref, *, negative_slope):
    # Whole contraction in one MXU pass: no scratch accumulator, bias and
    # LeakyReLU fused directly into the (lane-dense) output store.
    y = jnp.dot(x_ref[...], w_ref[...], preferred_element_type=jnp.float32)
    y = y + b_ref[...]  # bias kept in f32
    o_ref[...] = jnp.where(y >= 0.0, y, negative_slope * y).astype(o_ref.dtype)


def _multi_k_kernel(x_ref, w_ref, b_ref, o_ref, acc_ref, *, negative_slope):
    k = pl.program_id(2)

    @pl.when(k == 0)
    def _():
        # Fold the bias into the accumulator init (saves the epilogue add +
        # one VMEM read).
        acc_ref[...] = jnp.broadcast_to(b_ref[...], acc_ref.shape)

    acc_ref[...] += jnp.dot(
        x_ref[...], w_ref[...], preferred_element_type=jnp.float32
    )

    @pl.when(k == pl.num_programs(2) - 1)
    def _():
        y = acc_ref[...]
        o_ref[...] = jnp.where(y >= 0.0, y, negative_slope * y).astype(o_ref.dtype)


def linear_unit(
    x,
    w,
    b,
    *,
    negative_slope=0.2,
    matmul_dtype=jnp.bfloat16,   # MXU operand dtype; pass jnp.float32 for exact
    tm=None,
    tn=None,
    tk=None,                     # setting tk forces the streamed multi-K path
):
    """x: (B, K), w: (K, N), b: (N,)  ->  LeakyReLU(x @ w + b), shape (B, N).

    Note: the default bf16 operand path rounds x and w to bf16 before the
    matmul (f32 accumulation / f32 epilogue). Expect ~1e-2-level absolute
    differences vs. an all-f32 reference; use matmul_dtype=jnp.float32 when
    exact f32 numerics are required.
    """
    B, K = x.shape
    Kw, N = w.shape
    assert K == Kw and b.shape == (N,)
    out_dtype = x.dtype

    op_dtype = jnp.dtype(matmul_dtype) if matmul_dtype is not None else jnp.dtype(x.dtype)
    op_b = op_dtype.itemsize
    out_b = jnp.dtype(out_dtype).itemsize
    vmem_cap = _vmem_capacity_bytes()

    # --- Tile selection: minimal padding, lane/sublane aligned, big tiles. ---
    if tm is None:
        tm, num_m, Bp = _pick_tile(B, 8, 512)
    else:
        tm = _round_up(tm, 8)
        Bp = _round_up(B, tm)
        num_m = Bp // tm
    if tn is None:
        tn, num_n, Np = _pick_tile(N, 128, 512)
    else:
        tn = _round_up(tn, 128)
        Np = _round_up(N, tn)
        num_n = Np // tn

    Kp_full = _round_up(K, 128)
    # Single-K fast path footprint (double-buffered tiles, no accumulator).
    single_fp = (
        2 * tm * Kp_full * op_b
        + 2 * Kp_full * tn * op_b
        + 2 * tn * 4
        + 2 * tm * tn * out_b
    )
    use_single_k = (tk is None) and (single_fp <= int(0.6 * vmem_cap))

    if use_single_k:
        tk_ = Kp_full
        Kp = Kp_full
        num_k = 1
    else:
        if tk is None:
            tk_, num_k, Kp = _pick_tile(K, 128, 2048)
        else:
            tk_ = _round_up(tk, 128)
            Kp = _round_up(K, tk_)
            num_k = Kp // tk_

    # --- Cast first (halves the padding pass' bytes), then zero-pad only the
    #     dims the tiling actually needs; padded rows/cols are exact no-ops.
    xp = x.astype(op_dtype) if x.dtype != op_dtype else x
    wp = w.astype(op_dtype) if w.dtype != op_dtype else w
    if (Bp, Kp) != (B, K):
        xp = jnp.pad(xp, ((0, Bp - B), (0, Kp - K)))
    if (Kp, Np) != (K, N):
        wp = jnp.pad(wp, ((0, Kp - K), (0, Np - N)))
    bp = b.astype(jnp.float32)
    if Np != N:
        bp = jnp.pad(bp, (0, Np - N))
    bp = bp.reshape(1, Np)

    if use_single_k:
        kernel = functools.partial(_single_k_kernel, negative_slope=negative_slope)
        vmem_needed = single_fp
        cost = pl.CostEstimate(
            flops=2 * Bp * Kp * Np,
            transcendentals=0,
            bytes_accessed=num_n * Bp * Kp * op_b  # x re-read once per N tile
            + Kp * Np * op_b                       # W read exactly once
            + Np * 4
            + Bp * Np * out_b,
        )
        grid_spec = pltpu.PrefetchScalarGridSpec(
            num_scalar_prefetch=0,
            # N outer, M inner: the W column-block index (0, j) is constant
            # across all M tiles, so W is DMA'd from HBM exactly once.
            grid=(num_n, num_m),
            in_specs=[
                pl.BlockSpec((tm, Kp), lambda j, i: (i, 0)),   # x row tile, full K
                pl.BlockSpec((Kp, tn), lambda j, i: (0, j)),   # resident W col block
                pl.BlockSpec((1, tn), lambda j, i: (0, j)),    # bias (f32)
            ],
            out_specs=pl.BlockSpec((tm, tn), lambda j, i: (i, j)),
        )
        dims = ("parallel", "parallel")
    else:
        kernel = functools.partial(_multi_k_kernel, negative_slope=negative_slope)
        vmem_needed = (
            2 * tm * tk_ * op_b
            + 2 * tk_ * tn * op_b
            + 2 * tn * 4
            + 2 * tm * tn * out_b
            + tm * tn * 4                           # f32 accumulator
        )
        cost = pl.CostEstimate(
            flops=2 * Bp * Kp * Np,
            transcendentals=0,
            bytes_accessed=num_n * Bp * Kp * op_b
            + num_m * Kp * Np * op_b                # W re-streamed per M tile
            + num_m * Np * 4
            + Bp * Np * out_b,
        )
        grid_spec = pltpu.PrefetchScalarGridSpec(
            num_scalar_prefetch=0,
            grid=(num_m, num_n, num_k),             # reduction axis last
            in_specs=[
                pl.BlockSpec((tm, tk_), lambda i, j, k: (i, k)),
                pl.BlockSpec((tk_, tn), lambda i, j, k: (k, j)),
                pl.BlockSpec((1, tn), lambda i, j, k: (0, j)),
            ],
            out_specs=pl.BlockSpec((tm, tn), lambda i, j, k: (i, j)),
            scratch_shapes=[pltpu.VMEM((tm, tn), jnp.float32)],
        )
        dims = ("parallel", "parallel", "arbitrary")

    # Explicit, generation-aware VMEM budget with headroom for compiler scratch.
    vmem_limit = int(min(max(int(1.5 * vmem_needed), 16 << 20), int(0.75 * vmem_cap)))

    out = pl.pallas_call(
        kernel,
        out_shape=jax.ShapeDtypeStruct((Bp, Np), out_dtype),
        grid_spec=grid_spec,
        compiler_params=pltpu.CompilerParams(
            dimension_semantics=dims,
            vmem_limit_bytes=vmem_limit,
        ),
        cost_estimate=cost,
    )(xp, wp, bp)

    return out[:B, :N]


def _reference(x, w, b, negative_slope=0.2):
    y = x @ w + b
    return jnp.where(y >= 0.0, y, negative_slope * y)


if __name__ == "__main__":
    # TODO(synk): batchnorm=True branch (nn.BatchNorm1d) not implemented; the
    # module default (batchnorm=False) is what this kernel covers.
    key = jax.random.PRNGKey(0)

    # Case 1: small shapes consistent with the module (batch=8, in=32, out=64).
    B, IN_F, OUT_F = 8, 32, 64
    kx, kw, kb, key = *jax.random.split(key, 3), jax.random.fold_in(key, 1)
    x = jax.random.normal(kx, (B, IN_F), dtype=jnp.float32)
    bound = 1.0 / (IN_F ** 0.5)
    w = jax.random.uniform(kw, (IN_F, OUT_F), jnp.float32, -bound, bound)
    b = jax.random.uniform(kb, (OUT_F,), jnp.float32, -bound, bound)
    ref = _reference(x, w, b)

    # Default bf16-operand path (f32 accumulate) — looser tolerance.
    out = jax.block_until_ready(linear_unit(x, w, b))
    assert out.shape == (B, OUT_F)
    assert jnp.allclose(out, ref, atol=5e-2, rtol=5e-2)

    # Exact f32-operand path — tight tolerance.
    out_f32 = jax.block_until_ready(linear_unit(x, w, b, matmul_dtype=jnp.float32))
    assert jnp.allclose(out_f32, ref, atol=1e-5, rtol=1e-5)

    # Case 2: odd, non-aligned shapes (padding + single-K resident-W path).
    B2, IN2, OUT2 = 300, 200, 130
    kx2, kw2, kb2 = jax.random.split(key, 3)
    x2 = jax.random.normal(kx2, (B2, IN2), dtype=jnp.float32)
    bound2 = 1.0 / (IN2 ** 0.5)
    w2 = jax.random.uniform(kw2, (IN2, OUT2), jnp.float32, -bound2, bound2)
    b2 = jax.random.uniform(kb2, (OUT2,), jnp.float32, -bound2, bound2)
    ref2 = _reference(x2, w2, b2)

    out2 = jax.block_until_ready(linear_unit(x2, w2, b2))
    assert out2.shape == (B2, OUT2)
    assert jnp.allclose(out2, ref2, atol=5e-2, rtol=5e-2)

    out2_f32 = jax.block_until_ready(linear_unit(x2, w2, b2, matmul_dtype=jnp.float32))
    assert jnp.allclose(out2_f32, ref2, atol=1e-4, rtol=1e-4)

    # Case 3: force the streamed multi-K path (K split into 2 tiles) to
    # exercise the accumulator + bias-fold + epilogue code.
    out3 = jax.block_until_ready(linear_unit(x2, w2, b2, tk=128))
    assert out3.shape == (B2, OUT2)
    assert jnp.allclose(out3, ref2, atol=5e-2, rtol=5e-2)

    out3_f32 = jax.block_until_ready(
        linear_unit(x2, w2, b2, tk=128, matmul_dtype=jnp.float32)
    )
    assert jnp.allclose(out3_f32, ref2, atol=1e-4, rtol=1e-4)

    print("KERNEL_OK")
</pallas_src>

<mosaic_0001>
module attributes {stable_mosaic.version = 11 : i64} {
  func.func @_single_k_kernel(%arg0: i32, %arg1: i32, %arg2: memref<8x128xbf16, #tpu.memory_space<vmem>>, %arg3: memref<128x128xbf16, #tpu.memory_space<vmem>>, %arg4: memref<1x128xf32, #tpu.memory_space<vmem>>, %arg5: memref<8x128xf32, #tpu.memory_space<vmem>>) attributes {dimension_semantics = [#tpu.dimension_semantics<parallel>, #tpu.dimension_semantics<parallel>], iteration_bounds = array<i64: 1, 1>, scalar_prefetch = 0 : i64, scratch_operands = 0 : i64, tpu.core_type = #tpu.core_type<tc>, window_params = [{transform_indices = @transform_0, window_bounds = array<i64: 8, 128>}, {transform_indices = @transform_1, window_bounds = array<i64: 128, 128>}, {transform_indices = @transform_2, window_bounds = array<i64: 1, 128>}, {transform_indices = @transform_3, window_bounds = array<i64: 8, 128>}]} {
    %c0 = arith.constant 0 : index
    %c0_0 = arith.constant 0 : index
    %0 = vector.load %arg2[%c0, %c0_0] : memref<8x128xbf16, #tpu.memory_space<vmem>>, vector<8x128xbf16>
    %c0_1 = arith.constant 0 : index
    %c0_2 = arith.constant 0 : index
    %1 = vector.load %arg3[%c0_1, %c0_2] : memref<128x128xbf16, #tpu.memory_space<vmem>>, vector<128x128xbf16>
    %cst = arith.constant dense<0.000000e+00> : vector<8x128xf32>
    %2 = tpu.matmul %0, %1, %cst {dimension_numbers = #tpu.dot_dimension_numbers<[1], [0], [0], [1], [0, 0, 1, 1], [], []>} : vector<8x128xbf16>, vector<128x128xbf16>, vector<8x128xf32> -> vector<8x128xf32>
    %c0_3 = arith.constant 0 : index
    %c0_4 = arith.constant 0 : index
    %3 = vector.load %arg4[%c0_3, %c0_4] : memref<1x128xf32, #tpu.memory_space<vmem>>, vector<1x128xf32>
    %4 = vector.broadcast %3 : vector<1x128xf32> to vector<8x128xf32>
    %5 = arith.addf %2, %4 : vector<8x128xf32>
    %cst_5 = arith.constant 0.000000e+00 : f32
    %6 = vector.broadcast %cst_5 : f32 to vector<8x128xf32>
    %7 = arith.cmpf oge, %5, %6 : vector<8x128xf32>
    %cst_6 = arith.constant 2.000000e-01 : f32
    %8 = vector.broadcast %cst_6 : f32 to vector<8x128xf32>
    %9 = arith.mulf %8, %5 : vector<8x128xf32>
    %10 = arith.select %7, %5, %9 : vector<8x128xi1>, vector<8x128xf32>
    %c0_7 = arith.constant 0 : index
    %c0_8 = arith.constant 0 : index
    %11 = vector.load %arg5[%c0_7, %c0_8] : memref<8x128xf32, #tpu.memory_space<vmem>>, vector<8x128xf32>
    tpu.vector_store %arg5[%c0_7, %c0_8], %10 {strides = array<i32>} : memref<8x128xf32, #tpu.memory_space<vmem>>, vector<8x128xf32>,
    return
  }
  func.func @transform_0(%arg0: i32, %arg1: i32) -> (i32, i32) {
    %c0_i32 = arith.constant 0 : i32
    %c0_i32_0 = arith.constant 0 : i32
    return %arg1, %c0_i32 : i32, i32
  }
  func.func @transform_1(%arg0: i32, %arg1: i32) -> (i32, i32) {
    %c0_i32 = arith.constant 0 : i32
    %c0_i32_0 = arith.constant 0 : i32
    return %c0_i32, %arg0 : i32, i32
  }
  func.func @transform_2(%arg0: i32, %arg1: i32) -> (i32, i32) {
    %c0_i32 = arith.constant 0 : i32
    %c0_i32_0 = arith.constant 0 : i32
    return %c0_i32, %arg0 : i32, i32
  }
  func.func @transform_3(%arg0: i32, %arg1: i32) -> (i32, i32) {
    %c0_i32 = arith.constant 0 : i32
    return %arg1, %arg0 : i32, i32
  }
}

</mosaic_0001>

<llo_original>
// kernel: tpu_custom_call.1
$region0: #{tpu_custom_call.1}
  #allocation0 [shape = 'u32[]', space=smem, size = 0x4, offset = 0x4, fixed_abs, tag = 'smem constant byte address 0x4 - core index']
  #allocation1 [shape = 'u32[144,128]{1,0:T(1,128)}', space=vmem, size = 0x12000, scoped, tag = 'internal scratch']
  %s0 = inlined_call_operand.hbm [shape: bf16[8,128], index: 0, kind: input, shape index: {}]
  %s1 = inlined_call_operand.hbm [shape: bf16[128,128], index: 1, kind: input, shape index: {}]
  %s2 = inlined_call_operand.vmem [shape: f32[1,128], index: 2, kind: input, shape index: {}]
  %s3 = inlined_call_operand.hbm [shape: f32[8,128], index: 3, kind: output, shape index: {}]
  %s4 = sld [smem:[#allocation0]]
  $region30: #{tpu_custom_call.1} parent=0
    _
  %s6 = ssub.s32 1, %s4
  %s7 = scalar_select 0, %s6, %s4
  $region1: #{tpu_custom_call.1} parent=0
    #allocation2 [shape = 'u8[2048]{0}', space=vmem, size = 0x800, scoped, tag = 'input window, operand 0, single buffered']
    #allocation3 [shape = 's32[1]{0}', space=sflag, size = 0x4, scoped, tag = 'scoped memory for tpu_custom_call.1']
    #allocation4 [shape = 's32[1]{0}', space=sflag, size = 0x4, scoped, tag = 'scoped memory for tpu_custom_call.1']
    #allocation5 [shape = 'u8[32768]{0}', space=vmem, size = 0x8000, scoped, tag = 'input window, operand 1, single buffered']
    #allocation6 [shape = 's32[1]{0}', space=sflag, size = 0x4, scoped, tag = 'scoped memory for tpu_custom_call.1']
    #allocation7 [shape = 'u8[4096]{0}', space=vmem, size = 0x1000, scoped, tag = 'output window, operand 0, single buffered']
    %8 = vsyncpa [#allocation3], 0
    %9 = vsyncpa [#allocation6], 0
    %10 = vsyncpa [#allocation4], 0
    // Predicated region
    $region2: #{tpu_custom_call.1} parent=1 // pred_check
      _
    $region3: #{tpu_custom_call.1} parent=1 // pred_check_branch
      %12 = sbr.rel (0) target = $region5
    $region4: #{tpu_custom_call.1} parent=1 // pred_region
      %s14 = ssub.s32 64, 64
      %15 = vsyncadd [#allocation3], %s14
      %s17 = sshll.u32 [#allocation2], 4
      %s18 = int_to_ptr.vmem [resolvable:$true] %s17
      %20 = dma.hbm_to_vmem [thread:$0]  %s0, 64, %s18, [#allocation3]
    $region5: #{tpu_custom_call.1} parent=1 // pred_fallthru
      _
    // Predicated region
    $region6: #{tpu_custom_call.1} parent=1 // pred_check
      _
    $region7: #{tpu_custom_call.1} parent=1 // pred_check_branch
      %22 = sbr.rel (0) target = $region9
    $region8: #{tpu_custom_call.1} parent=1 // pred_region
      %s24 = ssub.s32 1024, 1024
      %25 = vsyncadd [#allocation6], %s24
      %s26 = sshll.u32 [#allocation5], 4
      %s27 = int_to_ptr.vmem [resolvable:$true] %s26
      %32 = dma.hbm_to_vmem [thread:$0]  %s1, 1024, %s27, [#allocation6], 64, 64, 4
    $region9: #{tpu_custom_call.1} parent=1 // pred_fallthru
      _
    // Predicated region
    $region10: #{tpu_custom_call.1} parent=1 // pred_check
      _
    $region11: #{tpu_custom_call.1} parent=1 // pred_check_branch
      %34 = sbr.rel (0) target = $region13
    $region12: #{tpu_custom_call.1} parent=1 // pred_region
      _
    $region13: #{tpu_custom_call.1} parent=1 // pred_fallthru
      _
    // Predicated region
    $region14: #{tpu_custom_call.1} parent=1 // pred_check
      _
    $region15: #{tpu_custom_call.1} parent=1 // pred_check_branch
      %36 = sbr.rel (0) target = $region17
    $region16: #{tpu_custom_call.1} parent=1 // pred_region
      %37 = dma.done [#allocation3], 64
    $region17: #{tpu_custom_call.1} parent=1 // pred_fallthru
      _
    // Predicated region
    $region18: #{tpu_custom_call.1} parent=1 // pred_check
      _
    $region19: #{tpu_custom_call.1} parent=1 // pred_check_branch
      %39 = sbr.rel (0) target = $region21
    $region20: #{tpu_custom_call.1} parent=1 // pred_region
      %40 = dma.done [#allocation6], 1024
    $region21: #{tpu_custom_call.1} parent=1 // pred_fallthru
      _
    %v42 = vld [vmem:[#allocation2] sm:$0xf]
    %v43 = vld [vmem:[#allocation5] sm:$0xf]
    %v44 = vld [vmem:[#allocation5 + $0x4] sm:$0xf]
    %v45 = vld [vmem:[#allocation5 + $0x8] sm:$0xf]
    %v46 = vld [vmem:[#allocation5 + $0xc] sm:$0xf]
    %v47 = vld [vmem:[#allocation5 + $0x10] sm:$0xf]
    %v48 = vld [vmem:[#allocation5 + $0x14] sm:$0xf]
    %v49 = vld [vmem:[#allocation5 + $0x18] sm:$0xf]
    %v50 = vld [vmem:[#allocation5 + $0x1c] sm:$0xf]
    %v51 = vld [vmem:[#allocation5 + $0x20] sm:$0xf]
    %v52 = vld [vmem:[#allocation5 + $0x24] sm:$0xf]
    %v53 = vld [vmem:[#allocation5 + $0x28] sm:$0xf]
    %v54 = vld [vmem:[#allocation5 + $0x2c] sm:$0xf]
    %v55 = vld [vmem:[#allocation5 + $0x30] sm:$0xf]
    %v56 = vld [vmem:[#allocation5 + $0x34] sm:$0xf]
    %v57 = vld [vmem:[#allocation5 + $0x38] sm:$0xf]
    %v58 = vld [vmem:[#allocation5 + $0x3c] sm:$0xf]
    %v59 = vld [vmem:[%s2] sm:$0x1]
    %v61 = vlaneseq
    %v62 = vshrl.u32 %v61, 7
    %v63 = vsub.s32 0, %v62
    %v64 = vrot.slane %v59, %v63
    %v82 = vunpack.c.l.b16 %v43
    %v83 = vunpack.c.l.b16 %v44
    %v84 = vunpack.c.l.b16 %v45
    %v85 = vunpack.c.l.b16 %v46
    %v86 = vunpack.c.l.b16 %v47
    %v87 = vunpack.c.l.b16 %v48
    %v88 = vunpack.c.l.b16 %v49
    %v89 = vunpack.c.l.b16 %v50
    %v90 = vunpack.c.l.b16 %v51
    %v91 = vunpack.c.l.b16 %v52
    %v92 = vunpack.c.l.b16 %v53
    %v93 = vunpack.c.l.b16 %v54
    %v94 = vunpack.c.l.b16 %v55
    %v95 = vunpack.c.l.b16 %v56
    %v96 = vunpack.c.l.b16 %v57
    %v97 = vunpack.c.l.b16 %v58
    %v98 = vpack.c.b16 %v83, %v82
    %v99 = vpack.c.b16 %v85, %v84
    %v100 = vpack.c.b16 %v87, %v86
    %v101 = vpack.c.b16 %v89, %v88
    %v102 = vpack.c.b16 %v91, %v90
    %v103 = vpack.c.b16 %v93, %v92
    %v104 = vpack.c.b16 %v95, %v94
    %v105 = vpack.c.b16 %v97, %v96
    %114 = vmatprep.subr.bf16.mxu0 0
    %115 = vmatpush1.bf16.msra.mxu0 %v98
    %116 = vmatprep.subr.bf16.mxu0 0
    %117 = vmatpush1.bf16.msra.mxu0 %v99
    %118 = vmatprep.subr.bf16.mxu0 0
    %119 = vmatpush1.bf16.msra.mxu0 %v100
    %120 = vmatprep.subr.bf16.mxu0 0
    %121 = vmatpush1.bf16.msra.mxu0 %v101
    %122 = vmatprep.subr.bf16.mxu0 0
    %123 = vmatpush1.bf16.msra.mxu0 %v102
    %124 = vmatprep.subr.bf16.mxu0 0
    %125 = vmatpush1.bf16.msra.mxu0 %v103
    %126 = vmatprep.subr.bf16.mxu0 0
    %127 = vmatpush1.bf16.msra.mxu0 %v104
    %128 = vmatprep.subr.bf16.mxu0 0
    %129 = vmatpush1.bf16.msra.mxu0 %v105
    %130 = vmatprep.subr.bf16.mxu0 0
    %131 = vmatpush1.bf16.msra.mxu0 0
    %132 = vmatprep.subr.bf16.mxu0 0
    %133 = vmatpush1.bf16.msra.mxu0 0
    %134 = vmatprep.subr.bf16.mxu0 0
    %135 = vmatpush1.bf16.msra.mxu0 0
    %136 = vmatprep.subr.bf16.mxu0 0
    %137 = vmatpush1.bf16.msra.mxu0 0
    %138 = vmatprep.subr.bf16.mxu0 0
    %139 = vmatpush1.bf16.msra.mxu0 0
    %140 = vmatprep.subr.bf16.mxu0 0
    %141 = vmatpush1.bf16.msra.mxu0 0
    %142 = vmatprep.subr.bf16.mxu0 0
    %143 = vmatpush1.bf16.msra.mxu0 0
    %144 = vmatprep.subr.bf16.mxu0 0
    %145 = vmatpush1.bf16.msra.mxu0 0
    %146 = vmatprep.mubr.bf16.mxu0 0
    %147 = vmatmul.mubr.bf16.gmra.mrb[0].mxu0 %v42
    %v148 = vpop.f32.mrb[0].mxu0
    %v149 = vadd.f32 %v64, %v148
    %v150 = vpop.f32.mrb[0].mxu0
    %v151 = vpop.f32.mrb[0].mxu0
    %v152 = vpop.f32.mrb[0].mxu0
    %153 = vdwg.mxu0
    %vm154 = vcmp.ge.f32.partialorder %v149, 0.0
    %v155 = vmul.f32 %v149, 0.2
    %v156 = vsel %vm154, %v149, %v155
    %157 = vst [vmem:[#allocation7] sm:$0xff] %v156
    // Predicated region
    $region22: #{tpu_custom_call.1} parent=1 // pred_check
      _
    $region23: #{tpu_custom_call.1} parent=1 // pred_check_branch
      %159 = sbr.rel (0) target = $region25
    $region24: #{tpu_custom_call.1} parent=1 // pred_region
      %s161 = ssub.s32 128, 128
      %162 = vsyncadd [#allocation4], %s161
      %s164 = sshll.u32 [#allocation7], 4
      %s165 = int_to_ptr.vmem [resolvable:$true] %s164
      %167 = dma.vmem_to_hbm [thread:$0]  %s165, 128, %s3, [#allocation4]
    $region25: #{tpu_custom_call.1} parent=1 // pred_fallthru
      _
    // Predicated region
    $region26: #{tpu_custom_call.1} parent=1 // pred_check
      _
    $region27: #{tpu_custom_call.1} parent=1 // pred_check_branch
      %169 = sbr.rel (0) target = $region29
    $region28: #{tpu_custom_call.1} parent=1 // pred_region
      %170 = dma.done [#allocation4], 128
    $region29: #{tpu_custom_call.1} parent=1 // pred_fallthru
      _
    %171 = vsyncpa [#allocation3], 1
    %172 = vsyncpa [#allocation6], 1
    %173 = vsyncpa [#allocation4], 1

</llo_original>
